<compile_context>
chip_gen: v5e
topology: v5e:2x2
jax: 0.10.0
libtpu: 0.0.40
codegen_flags: <defaults>
</compile_context>

<pallas_src>
import functools

import jax
import jax.numpy as jnp
from jax import lax
from jax.experimental import pallas as pl
from jax.experimental.pallas import tpu as pltpu


def _prm_kernel(ulp_ref, lp_ref, o_ref, *, mxu_dtype):
    # ulp_ref: (1, Cq, Tq)  query tile     (slice of ul_p along HW)
    # lp_ref : (1, Ck, HW)  key/value row  (full l_p for this batch element)
    # o_ref  : (1, Ck, Tq)  output tile
    q = ulp_ref[0]                                   # (Cq, Tq)
    k = lp_ref[0]                                    # (Ck, HW)

    # energy[i, j] = sum_c q[c, i] * k[c, j]  -> (Tq, HW)
    # The PyTorch (q/m) @ (k/m) * m * m rescale cancels exactly and is omitted.
    energy = lax.dot_general(
        q.astype(mxu_dtype), k.astype(mxu_dtype),
        (((0,), (0,)), ((), ())),
        preferred_element_type=jnp.float32)

    # Row-wise softmax in f32 (rows are complete: full HW is in the lane axis).
    row_max = jnp.max(energy, axis=-1, keepdims=True)
    p = jnp.exp(energy - row_max)
    inv = pl.reciprocal(jnp.sum(p, axis=-1, keepdims=True), approx=True)
    att = p * inv                                    # (Tq, HW), f32

    # out[c, i] = sum_j v[c, j] * att[i, j]   -> (Ck, Tq)   (v == k == l_p)
    out = lax.dot_general(
        k.astype(mxu_dtype), att.astype(mxu_dtype),
        (((1,), (1,)), ((), ())),
        preferred_element_type=jnp.float32)
    o_ref[0] = out.astype(o_ref.dtype)


def _pick_query_tile(hw):
    """Largest lane-aligned query tile <= 512 that divides HW (else full HW)."""
    if hw % 128 != 0:
        return hw                     # full-extent block (allowed by (8,128) rule)
    for cand in (512, 384, 256, 128):
        if hw % cand == 0:
            return cand
    return hw


def prm_forward(l_p, ul_p, num_l, *, use_bf16_mxu=True):
    B, C, H, W = ul_p.shape
    HW = H * W
    lp3 = l_p.reshape(num_l, -1, HW)        # (num_l, Ck, HW)  key/value
    ulp3 = ul_p.reshape(num_l, -1, HW)      # (num_l, Cq, HW)  query
    Ck = lp3.shape[1]
    Cq = ulp3.shape[1]

    Tq = _pick_query_tile(HW)
    n_qt = HW // Tq

    mxu_dtype = jnp.bfloat16 if use_bf16_mxu else jnp.float32

    # Explicit VMEM budget: double-buffered I/O blocks + f32 intermediates
    # (energy / p / att of shape (Tq, HW)) with headroom; capped at 64 MiB
    # so the same tiling is valid on v7x.
    itemsize = jnp.dtype(l_p.dtype).itemsize
    io_bytes = 2 * (Ck * HW + Cq * Tq + Ck * Tq) * itemsize
    scratch_bytes = 4 * Tq * HW * 4
    vmem_limit = int(min(max(io_bytes + scratch_bytes, 16 * 2**20), 64 * 2**20))

    kernel = functools.partial(_prm_kernel, mxu_dtype=mxu_dtype)

    out3 = pl.pallas_call(
        kernel,
        out_shape=jax.ShapeDtypeStruct((num_l, Ck, HW), l_p.dtype),
        grid=(num_l, n_qt),
        in_specs=[
            # query tile: advances along the inner (qi) grid axis
            pl.BlockSpec((1, Cq, Tq), lambda b, qi: (b, 0, qi)),
            # key/value: constant block index across qi -> stays resident in VMEM
            pl.BlockSpec((1, Ck, HW), lambda b, qi: (b, 0, 0)),
        ],
        out_specs=pl.BlockSpec((1, Ck, Tq), lambda b, qi: (b, 0, qi)),
        compiler_params=pltpu.CompilerParams(
            dimension_semantics=("parallel", "parallel"),
            vmem_limit_bytes=vmem_limit),
    )(ulp3, lp3)

    return out3.reshape(B, C, H, W)


def prm_reference(l_p, ul_p, num_l):
    """Pure-JAX reference matching the PyTorch forward (with the m scaling)."""
    B, C, H, W = ul_p.shape
    HW = H * W
    q = ul_p.reshape(num_l, -1, HW).transpose(0, 2, 1)   # (num_l, HW, C)
    k = l_p.reshape(num_l, -1, HW)                       # (num_l, C, HW)
    m = jnp.max(k)
    energy = jnp.einsum('bic,bcj->bij', q / m, k / m).astype(jnp.float32) * m * m
    att = jax.nn.softmax(energy, axis=-1)
    out = jnp.einsum('bcj,bij->bci', k, att)
    return out.reshape(B, C, H, W).astype(l_p.dtype)


if __name__ == "__main__":
    key = jax.random.PRNGKey(0)
    k1, k2 = jax.random.split(key)

    B, C, H, W = 2, 4, 16, 16
    num_l = 2  # must equal B for the PyTorch .view() reshapes to be valid

    l_p = jax.random.normal(k1, (B, C, H, W), dtype=jnp.float32)
    ul_p = jax.random.normal(k2, (B, C, H, W), dtype=jnp.float32)

    ref = prm_reference(l_p, ul_p, num_l)

    # Exact-semantics check: f32 MXU operands (scaling removal + approx
    # reciprocal only change rounding, so use a modest tolerance).
    out_f32 = prm_forward(l_p, ul_p, num_l, use_bf16_mxu=False)
    jax.block_until_ready(out_f32)
    assert out_f32.shape == (B, C, H, W)
    assert jnp.allclose(out_f32, ref, rtol=2e-3, atol=2e-3), "f32 kernel mismatch"

    # Performance default: bf16 MXU operands, f32 accumulation + f32 softmax.
    out = prm_forward(l_p, ul_p, num_l)
    jax.block_until_ready(out)
    assert out.shape == (B, C, H, W)
    assert jnp.allclose(out, ref, rtol=1e-1, atol=1e-1), "bf16 kernel mismatch"

    print("KERNEL_OK")
</pallas_src>

<mosaic_0001>
module attributes {stable_mosaic.version = 11 : i64} {
  func.func @_prm_kernel(%arg0: i32, %arg1: i32, %arg2: memref<1x4x256xf32, #tpu.memory_space<vmem>>, %arg3: memref<1x4x256xf32, #tpu.memory_space<vmem>>, %arg4: memref<1x4x256xf32, #tpu.memory_space<vmem>>) attributes {dimension_semantics = [#tpu.dimension_semantics<parallel>, #tpu.dimension_semantics<parallel>], iteration_bounds = array<i64: 2, 1>, scalar_prefetch = 0 : i64, scratch_operands = 0 : i64, tpu.core_type = #tpu.core_type<tc>, window_params = [{transform_indices = @transform_0, window_bounds = array<i64: 1, 4, 256>}, {transform_indices = @transform_1, window_bounds = array<i64: 1, 4, 256>}, {transform_indices = @transform_2, window_bounds = array<i64: 1, 4, 256>}]} {
    %c0 = arith.constant 0 : index
    %c0_0 = arith.constant 0 : index
    %c0_1 = arith.constant 0 : index
    %0 = vector.load %arg2[%c0, %c0_0, %c0_1] : memref<1x4x256xf32, #tpu.memory_space<vmem>>, vector<1x4x256xf32>
    %1 = vector.shape_cast %0 : vector<1x4x256xf32> to vector<4x256xf32>
    %c0_2 = arith.constant 0 : index
    %c0_3 = arith.constant 0 : index
    %c0_4 = arith.constant 0 : index
    %2 = vector.load %arg3[%c0_2, %c0_3, %c0_4] : memref<1x4x256xf32, #tpu.memory_space<vmem>>, vector<1x4x256xf32>
    %3 = vector.shape_cast %2 : vector<1x4x256xf32> to vector<4x256xf32>
    %cst = arith.constant dense<0.000000e+00> : vector<256x256xf32>
    %4 = tpu.matmul %1, %3, %cst {dimension_numbers = #tpu.dot_dimension_numbers<[0], [0], [1], [1], [0, 1, 1, 1], [], []>} : vector<4x256xf32>, vector<4x256xf32>, vector<256x256xf32> -> vector<256x256xf32>
    %cst_5 = arith.constant dense<0xFF800000> : vector<256xf32>
    %5 = vector.multi_reduction <maximumf>, %4, %cst_5 [1] : vector<256x256xf32> to vector<256xf32>
    %6 = vector.shape_cast %5 : vector<256xf32> to vector<256x1xf32>
    %7 = vector.broadcast %6 : vector<256x1xf32> to vector<256x256xf32>
    %8 = arith.subf %4, %7 : vector<256x256xf32>
    %9 = math.exp %8 : vector<256x256xf32>
    %cst_6 = arith.constant dense<0.000000e+00> : vector<256xf32>
    %10 = vector.multi_reduction <add>, %9, %cst_6 [1] : vector<256x256xf32> to vector<256xf32>
    %11 = vector.shape_cast %10 : vector<256xf32> to vector<256x1xf32>
    %12 = tpu.reciprocal %11 {approx = true} : vector<256x1xf32> -> vector<256x1xf32>
    %13 = vector.broadcast %12 : vector<256x1xf32> to vector<256x256xf32>
    %14 = arith.mulf %9, %13 : vector<256x256xf32>
    %cst_7 = arith.constant dense<0.000000e+00> : vector<4x256xf32>
    %15 = tpu.matmul %3, %14, %cst_7 {dimension_numbers = #tpu.dot_dimension_numbers<[1], [1], [0], [0], [0, 0, 1, 0], [], []>} : vector<4x256xf32>, vector<256x256xf32>, vector<4x256xf32> -> vector<4x256xf32>
    %c0_8 = arith.constant 0 : index
    %c0_9 = arith.constant 0 : index
    %c0_10 = arith.constant 0 : index
    %16 = vector.load %arg4[%c0_8, %c0_9, %c0_10] : memref<1x4x256xf32, #tpu.memory_space<vmem>>, vector<1x4x256xf32>
    %17 = vector.shape_cast %16 : vector<1x4x256xf32> to vector<4x256xf32>
    %18 = vector.shape_cast %15 : vector<4x256xf32> to vector<1x4x256xf32>
    tpu.vector_store %arg4[%c0_8, %c0_9, %c0_10], %18 {strides = array<i32>} : memref<1x4x256xf32, #tpu.memory_space<vmem>>, vector<1x4x256xf32>,
    return
  }
  func.func @transform_0(%arg0: i32, %arg1: i32) -> (i32, i32, i32) {
    %c0_i32 = arith.constant 0 : i32
    %c0_i32_0 = arith.constant 0 : i32
    return %arg0, %c0_i32, %arg1 : i32, i32, i32
  }
  func.func @transform_1(%arg0: i32, %arg1: i32) -> (i32, i32, i32) {
    %c0_i32 = arith.constant 0 : i32
    %c0_i32_0 = arith.constant 0 : i32
    %c0_i32_1 = arith.constant 0 : i32
    return %arg0, %c0_i32, %c0_i32_0 : i32, i32, i32
  }
  func.func @transform_2(%arg0: i32, %arg1: i32) -> (i32, i32, i32) {
    %c0_i32 = arith.constant 0 : i32
    %c0_i32_0 = arith.constant 0 : i32
    return %arg0, %c0_i32, %arg1 : i32, i32, i32
  }
}

</mosaic_0001>

<llo_original>
// kernel: tpu_custom_call.1
$region0: #{tpu_custom_call.1}
  #allocation0 [shape = 'u32[]', space=smem, size = 0x4, offset = 0x4, fixed_abs, tag = 'smem constant byte address 0x4 - core index']
  #allocation1 [shape = 'u32[72,128]{1,0:T(1,128)}', space=vmem, size = 0x9000, scoped, tag = 'internal scratch']
  %s0 = inlined_call_operand.hbm [shape: f32[2,4,256], index: 0, kind: input, shape index: {}]
  %s1 = inlined_call_operand.hbm [shape: f32[2,4,256], index: 1, kind: input, shape index: {}]
  %s2 = inlined_call_operand.hbm [shape: f32[2,4,256], index: 2, kind: output, shape index: {}]
  %s3 = sld [smem:[#allocation0]]
  $region49: #{tpu_custom_call.1} parent=0
    _
  %s5 = ssub.s32 1, %s3
  %s6 = scalar_select 0, %s5, %s3
  $region1: #{tpu_custom_call.1} parent=0
    #allocation2 [shape = 'u8[8192]{0}', space=vmem, size = 0x2000, scoped, tag = 'input window, operand 0']
    #allocation3 [shape = 's32[2]{0}', space=sflag, size = 0x8, scoped, tag = 'scoped memory for tpu_custom_call.1']
    #allocation4 [shape = 's32[2]{0}', space=sflag, size = 0x8, scoped, tag = 'scoped memory for tpu_custom_call.1']
    #allocation5 [shape = 'u8[8192]{0}', space=vmem, size = 0x2000, scoped, tag = 'input window, operand 1']
    #allocation6 [shape = 's32[2]{0}', space=sflag, size = 0x8, scoped, tag = 'scoped memory for tpu_custom_call.1']
    #allocation7 [shape = 'u8[8192]{0}', space=vmem, size = 0x2000, scoped, tag = 'output window, operand 0']
    %7 = vsyncpa [#allocation3], 0
    %s8 = scalar_lea.sflag [#allocation3], 1
    %9 = vsyncpa %s8, 0
    %10 = vsyncpa [#allocation6], 0
    %s11 = scalar_lea.sflag [#allocation6], 1
    %12 = vsyncpa %s11, 0
    %13 = vsyncpa [#allocation4], 0
    %s14 = scalar_lea.sflag [#allocation4], 1
    %15 = vsyncpa %s14, 0
    loop: start=0, step=1, limit=4
    $region2: #{tpu_custom_call.1} parent=1 // loop_pre_header
      _
    $region3: #{tpu_custom_call.1} parent=1 // loop_header
      %s17 = sphi 0, %s21
      %p18 = scmp.ge.s32.totalorder %s17, 4
      %s24 = sphi 0, %s36
      %s25 = sphi 0, %s32
      %s26 = sphi 0, %s24
      %s27 = sphi 0, %s25
      %s28 = sphi 0, %s26
      %s29 = sphi 0, %s27
      %s41 = sphi 0, %s43
      %s44 = sphi 0, %s41
      %s45 = sphi 0, %s44
      %s61 = sphi 0, %s45
      %s67 = sphi 0, %s69
      %s70 = sphi 0, %s67
      %s71 = sphi 0, %s70
      %s87 = sphi 0, %s71
      %s95 = sphi 0, %s97
      %s98 = sphi 0, %s95
      %s99 = sphi 0, %s98
      %s115 = sphi 0, %s99
    $region4: #{tpu_custom_call.1} parent=1 // loop_header_branch
      %20 = sbr.rel (%p18) target = $region8
    $region5: #{tpu_custom_call.1} parent=1 // loop_body
      %s22 = ssub.s32 %s17, 1
      %s23 = ssub.s32 %s17, 2
      %s30 = sadd.s32 1, %s25
      %p31 = scmp.ge.s32.totalorder %s30, 1
      %s32 = scalar_select %p31, 0, %s30
      %s33 = sadd.s32 1, %s24
      %s34 = scalar_select %p31, %s33, %s24
      %p35 = scmp.ge.s32.totalorder %s34, 2
      %s36 = scalar_select %p35, 0, %s34
      %s37 = ssub.s32 %s24, %s36
      %s38 = ssub.s32 %s25, %s32
      %s39 = sor.u32 %s37, %s38
      %p40 = scmp.eq.s32.totalorder %s39, 0
      %s42 = sadd.s32 %s41, 1
      %s43 = scalar_select %p40, %s41, %s42
      %p46 = pneg %p40
      %p47 = scmp.eq.s32.totalorder %s17, 1
      %p48 = por %p46, %p47
      %p49 = scmp.ne.s32.totalorder %s41, %s44
      %p50 = scmp.eq.s32.totalorder %s17, 0
      %p51 = por %p49, %p50
      %p52 = scmp.ne.s32.totalorder %s41, %s44
      %p53 = scmp.eq.s32.totalorder %s22, 1
      %p54 = por %p52, %p53
      %p55 = scmp.ne.s32.totalorder %s44, %s45
      %p56 = scmp.eq.s32.totalorder %s22, 0
      %p57 = por %p55, %p56
      %p58 = scmp.ne.s32.totalorder %s44, %s45
      %p59 = scmp.eq.s32.totalorder %s23, 1
      %p60 = por %p58, %p59
      %p62 = scmp.ne.s32.totalorder %s45, %s61
      %p63 = scmp.eq.s32.totalorder %s23, 0
      %p64 = por %p62, %p63
      %s65 = ssub.s32 %s24, %s36
      %p66 = scmp.eq.s32.totalorder %s65, 0
      %s68 = sadd.s32 %s67, 1
      %s69 = scalar_select %p66, %s67, %s68
      %p72 = pneg %p66
      %p73 = scmp.eq.s32.totalorder %s17, 1
      %p74 = por %p72, %p73
      %p75 = scmp.ne.s32.totalorder %s67, %s70
      %p76 = scmp.eq.s32.totalorder %s17, 0
      %p77 = por %p75, %p76
      %p78 = scmp.ne.s32.totalorder %s67, %s70
      %p79 = scmp.eq.s32.totalorder %s22, 1
      %p80 = por %p78, %p79
      %p81 = scmp.ne.s32.totalorder %s70, %s71
      %p82 = scmp.eq.s32.totalorder %s22, 0
      %p83 = por %p81, %p82
      %p84 = scmp.ne.s32.totalorder %s70, %s71
      %p85 = scmp.eq.s32.totalorder %s23, 1
      %p86 = por %p84, %p85
      %p88 = scmp.ne.s32.totalorder %s71, %s87
      %p89 = scmp.eq.s32.totalorder %s23, 0
      %p90 = por %p88, %p89
      %s91 = ssub.s32 %s24, %s36
      %s92 = ssub.s32 %s25, %s32
      %s93 = sor.u32 %s91, %s92
      %p94 = scmp.eq.s32.totalorder %s93, 0
      %s96 = sadd.s32 %s95, 1
      %s97 = scalar_select %p94, %s95, %s96
      %p100 = pneg %p94
      %p101 = scmp.eq.s32.totalorder %s17, 1
      %p102 = por %p100, %p101
      %p103 = scmp.ne.s32.totalorder %s95, %s98
      %p104 = scmp.eq.s32.totalorder %s17, 0
      %p105 = por %p103, %p104
      %p106 = scmp.ne.s32.totalorder %s95, %s98
      %p107 = scmp.eq.s32.totalorder %s22, 1
      %p108 = por %p106, %p107
      %p109 = scmp.ne.s32.totalorder %s98, %s99
      %p110 = scmp.eq.s32.totalorder %s22, 0
      %p111 = por %p109, %p110
      %p112 = scmp.ne.s32.totalorder %s98, %s99
      %p113 = scmp.eq.s32.totalorder %s23, 1
      %p114 = por %p112, %p113
      %p116 = scmp.ne.s32.totalorder %s99, %s115
      %p117 = scmp.eq.s32.totalorder %s23, 0
      %p118 = por %p116, %p117
      %p119 = scmp.le.s32.totalorder 1, %s17
      %p120 = scmp.lt.s32.totalorder %s17, 3
      %p121 = pnand %p119, %p120
      %p122 = pneg %p121
      // Predicated region
      $region9: #{tpu_custom_call.1} parent=5 // pred_check
        _
      $region10: #{tpu_custom_call.1} parent=5 // pred_check_branch
        %124 = sbr.rel (%p121) target = $region12
      $region11: #{tpu_custom_call.1} parent=5 // pred_region
        %s125 = ssub.s32 %s17, 1
      $region12: #{tpu_custom_call.1} parent=5 // pred_fallthru
        _
      %p126 = scmp.lt.s32.totalorder %s17, 2
      // Predicated region
      $region13: #{tpu_custom_call.1} parent=5 // pred_check
        %p127 = pneg %p126
      $region14: #{tpu_custom_call.1} parent=5 // pred_check_branch
        %129 = sbr.rel (%p127) target = $region16
      $region15: #{tpu_custom_call.1} parent=5 // pred_region
        // Predicated region
        $region17: #{tpu_custom_call.1} parent=15 // pred_check
          %p130 = pneg %p51
        $region18: #{tpu_custom_call.1} parent=15 // pred_check_branch
          %132 = sbr.rel (%p130) target = $region20
        $region19: #{tpu_custom_call.1} parent=15 // pred_region
          %s133 = sand.u32 %s41, 1
          %s134 = scalar_lea.sflag [#allocation3], %s133
          %s135 = sand.u32 %s41, 1
          %s136 = smul.addr %s135, 8
          %s137 = scalar_lea.vmem [#allocation2], %s136
          %s138 = smul.u32 2, %s25
          %140 = vsyncadd %s134, 0
          %s141 = smul.addr %s24, 2
          %s142 = sadd.s32 %s138, %s141
          %s143 = smul.addr %s142, 4
          %s144 = scalar_lea.hbm %s0, %s143
          %s146 = sshll.u32 %s144, 4
          %s147 = int_to_ptr.hbm [resolvable:$true] %s146
          %s148 = sshll.u32 %s137, 4
          %s149 = int_to_ptr.vmem [resolvable:$true] %s148
          %151 = dma.hbm_to_vmem [thread:$0]  %s147, 128, %s149, %s134
        $region20: #{tpu_custom_call.1} parent=15 // pred_fallthru
          _
        // Predicated region
        $region21: #{tpu_custom_call.1} parent=15 // pred_check
          %p152 = pneg %p77
        $region22: #{tpu_custom_call.1} parent=15 // pred_check_branch
          %154 = sbr.rel (%p152) target = $region24
        $region23: #{tpu_custom_call.1} parent=15 // pred_region
          %s155 = sand.u32 %s67, 1
          %s156 = scalar_lea.sflag [#allocation6], %s155
          %s157 = sand.u32 %s67, 1
          %s158 = smul.addr %s157, 8
          %s159 = scalar_lea.vmem [#allocation5], %s158
          %161 = vsyncadd %s156, 0
          %s162 = smul.addr %s24, 2
          %s163 = smul.addr %s162, 4
          %s164 = scalar_lea.hbm %s1, %s163
          %s166 = sshll.u32 %s164, 4
          %s167 = int_to_ptr.hbm [resolvable:$true] %s166
          %s168 = sshll.u32 %s159, 4
          %s169 = int_to_ptr.vmem [resolvable:$true] %s168
          %171 = dma.hbm_to_vmem [thread:$0]  %s167, 128, %s169, %s156
        $region24: #{tpu_custom_call.1} parent=15 // pred_fallthru
          _
      $region16: #{tpu_custom_call.1} parent=5 // pred_fallthru
        _
      %p172 = scmp.le.s32.totalorder 1, %s17
      %p173 = scmp.lt.s32.totalorder %s17, 3
      %p174 = pnand %p172, %p173
      %p175 = pneg %p174
      // Predicated region
      $region25: #{tpu_custom_call.1} parent=5 // pred_check
        _
      $region26: #{tpu_custom_call.1} parent=5 // pred_check_branch
        %177 = sbr.rel (%p174) target = $region28
      $region27: #{tpu_custom_call.1} parent=5 // pred_region
        %s178 = ssub.s32 %s17, 1
        %s179 = sand.u32 %s44, 1
        %s180 = scalar_lea.sflag [#allocation3], %s179
        %s181 = sand.u32 %s44, 1
        %s182 = smul.addr %s181, 8
        %s183 = scalar_lea.vmem [#allocation2], %s182
        // Predicated region
        $region29: #{tpu_custom_call.1} parent=27 // pred_check
          %p184 = pneg %p57
        $region30: #{tpu_custom_call.1} parent=27 // pred_check_branch
          %186 = sbr.rel (%p184) target = $region32
        $region31: #{tpu_custom_call.1} parent=27 // pred_region
          %188 = dma.done %s180, 128
        $region32: #{tpu_custom_call.1} parent=27 // pred_fallthru
          _
        %s189 = sand.u32 %s70, 1
        %s190 = scalar_lea.sflag [#allocation6], %s189
        %s191 = sand.u32 %s70, 1
        %s192 = smul.addr %s191, 8
        %s193 = scalar_lea.vmem [#allocation5], %s192
        // Predicated region
        $region33: #{tpu_custom_call.1} parent=27 // pred_check
          %p194 = pneg %p83
        $region34: #{tpu_custom_call.1} parent=27 // pred_check_branch
          %196 = sbr.rel (%p194) target = $region36
        $region35: #{tpu_custom_call.1} parent=27 // pred_region
          %198 = dma.done %s190, 128
        $region36: #{tpu_custom_call.1} parent=27 // pred_fallthru
          _
        %s199 = sand.u32 %s44, 1
        %s200 = scalar_lea.sflag [#allocation3], %s199
        %s201 = sand.u32 %s44, 1
        %s202 = smul.addr %s201, 8
        %s203 = scalar_lea.vmem [#allocation2], %s202
        %p204 = pneg %p57
        %p205 = pneg %p54
        %s206 = sand.u32 %s70, 1
        %s207 = scalar_lea.sflag [#allocation6], %s206
        %s208 = sand.u32 %s70, 1
        %s209 = smul.addr %s208, 8
        %s210 = scalar_lea.vmem [#allocation5], %s209
        %p211 = pneg %p83
        %p212 = pneg %p80
        %p213 = pneg %p111
        %p214 = pneg %p108
        %s215 = sand.u32 %s98, 1
        %s216 = scalar_lea.sflag [#allocation4], %s215
        %s217 = sand.u32 %s98, 1
        %s218 = smul.addr %s217, 8
        %s219 = scalar_lea.vmem [#allocation7], %s218
        %s220 = smul.u32 2, %s27
        %s221 = smul.u32 2, %s27
        %v222 = vld [vmem:[%s183] sm:$0xff]
        %v223 = vld [vmem:[%s193] sm:$0xff]
        %225 = vst [vmem:[#allocation1] ss:$2 sm:$0xff] %v222
        %v226 = vld.sshfl [vmem:[#allocation1] sm:$0xff pattern:$0x75316420]
        %v227 = vld.sshfl [vmem:[#allocation1 + $0x8] sm:$0xff pattern:$0x75316420]
        %230 = vxpose.xlu0.b32.start [1/16] %v226, 128
        %231 = vxpose.xlu0.b32.cont [2/16] 0.0, 128
        %232 = vxpose.xlu0.b32.cont [3/16] 0.0, 128
        %233 = vxpose.xlu0.b32.cont [4/16] 0.0, 128
        %234 = vxpose.xlu0.b32.cont [5/16] 0.0, 128
        %235 = vxpose.xlu0.b32.cont [6/16] 0.0, 128
        %236 = vxpose.xlu0.b32.cont [7/16] 0.0, 128
        %237 = vxpose.xlu0.b32.cont [8/16] 0.0, 128
        %238 = vxpose.xlu0.b32.cont [9/16] 0.0, 128
        %239 = vxpose.xlu0.b32.cont [10/16] 0.0, 128
        %240 = vxpose.xlu0.b32.cont [11/16] 0.0, 128
        %241 = vxpose.xlu0.b32.cont [12/16] 0.0, 128
        %242 = vxpose.xlu0.b32.cont [13/16] 0.0, 128
        %243 = vxpose.xlu0.b32.cont [14/16] 0.0, 128
        %244 = vxpose.xlu0.b32.cont [15/16] 0.0, 128
        %245 = vxpose.xlu0.b32.end [16/16] 0.0, 128
        %v246 = vpop.trf.xlu0
        %v247 = vpop.trf.xlu0
        %v248 = vpop.trf.xlu0
        %v249 = vpop.trf.xlu0
        %v250 = vpop.trf.xlu0
        %v251 = vpop.trf.xlu0
        %v252 = vpop.trf.xlu0
        %v253 = vpop.trf.xlu0
        %v254 = vpop.trf.xlu0
        %v255 = vpop.trf.xlu0
        %v256 = vpop.trf.xlu0
        %v257 = vpop.trf.xlu0
        %v258 = vpop.trf.xlu0
        %v259 = vpop.trf.xlu0
        %v260 = vpop.trf.xlu0
        %v261 = vpop.trf.xlu0
        %262 = vxpose.xlu0.b32.start [1/16] %v227, 128
        %263 = vxpose.xlu0.b32.cont [2/16] 0.0, 128
        %264 = vxpose.xlu0.b32.cont [3/16] 0.0, 128
        %265 = vxpose.xlu0.b32.cont [4/16] 0.0, 128
        %266 = vxpose.xlu0.b32.cont [5/16] 0.0, 128
        %267 = vxpose.xlu0.b32.cont [6/16] 0.0, 128
        %268 = vxpose.xlu0.b32.cont [7/16] 0.0, 128
        %269 = vxpose.xlu0.b32.cont [8/16] 0.0, 128
        %270 = vxpose.xlu0.b32.cont [9/16] 0.0, 128
        %271 = vxpose.xlu0.b32.cont [10/16] 0.0, 128
        %272 = vxpose.xlu0.b32.cont [11/16] 0.0, 128
        %273 = vxpose.xlu0.b32.cont [12/16] 0.0, 128
        %274 = vxpose.xlu0.b32.cont [13/16] 0.0, 128
        %275 = vxpose.xlu0.b32.cont [14/16] 0.0, 128
        %276 = vxpose.xlu0.b32.cont [15/16] 0.0, 128
        %277 = vxpose.xlu0.b32.end [16/16] 0.0, 128
        %v278 = vpop.trf.xlu0
        %v279 = vpop.trf.xlu0
        %v280 = vpop.trf.xlu0
        %v281 = vpop.trf.xlu0
        %v282 = vpop.trf.xlu0
        %v283 = vpop.trf.xlu0
        %v284 = vpop.trf.xlu0
        %v285 = vpop.trf.xlu0
        %v286 = vpop.trf.xlu0
        %v287 = vpop.trf.xlu0
        %v288 = vpop.trf.xlu0
        %v289 = vpop.trf.xlu0
        %v290 = vpop.trf.xlu0
        %v291 = vpop.trf.xlu0
        %v292 = vpop.trf.xlu0
        %v293 = vpop.trf.xlu0
        %295 = vst [vmem:[#allocation1] ss:$2 sm:$0xff] %v223
        %v296 = vld.sshfl [vmem:[#allocation1] sm:$0xff pattern:$0x75316420]
        %v297 = vld.sshfl [vmem:[#allocation1 + $0x8] sm:$0xff pattern:$0x75316420]
        %vm298 = vcmask 31744
        %v300 = vsel %vm298, %v246, 0
        %v303 = vsel %vm298, %v247, 0
        %v306 = vsel %vm298, %v248, 0
        %v309 = vsel %vm298, %v249, 0
        %v312 = vsel %vm298, %v250, 0
        %v315 = vsel %vm298, %v251, 0
        %v318 = vsel %vm298, %v252, 0
        %v321 = vsel %vm298, %v253, 0
        %v324 = vsel %vm298, %v254, 0
        %v327 = vsel %vm298, %v255, 0
        %v330 = vsel %vm298, %v256, 0
        %v333 = vsel %vm298, %v257, 0
        %v336 = vsel %vm298, %v258, 0
        %v339 = vsel %vm298, %v259, 0
        %v342 = vsel %vm298, %v260, 0
        %v345 = vsel %vm298, %v261, 0
        %v348 = vsel %vm298, %v278, 0
        %v351 = vsel %vm298, %v279, 0
        %v354 = vsel %vm298, %v280, 0
        %v357 = vsel %vm298, %v281, 0
        %v360 = vsel %vm298, %v282, 0
        %v363 = vsel %vm298, %v283, 0
        %v366 = vsel %vm298, %v284, 0
        %v369 = vsel %vm298, %v285, 0
        %v372 = vsel %vm298, %v286, 0
        %v375 = vsel %vm298, %v287, 0
        %v378 = vsel %vm298, %v288, 0
        %v381 = vsel %vm298, %v289, 0
        %v384 = vsel %vm298, %v290, 0
        %v387 = vsel %vm298, %v291, 0
        %v390 = vsel %vm298, %v292, 0
        %v393 = vsel %vm298, %v293, 0
        %vm395 = vcmask 1043456
        %v396 = vsel %vm395, %v296, 0
        %v398 = vsel %vm395, %v297, 0
        %400 = vmatpush.msra.mxu0 0.0
        %401 = vmatpush.msra.mxu0 0.0
        %402 = vmatpush.msra.mxu0 0.0
        %403 = vmatpush.msra.mxu0 0.0
        %404 = vmatpush.msra.mxu0 0.0
        %405 = vmatpush.msra.mxu0 0.0
        %406 = vmatpush.msra.mxu0 0.0
        %407 = vmatpush.msra.mxu0 0.0
        %408 = vmatpush.msra.mxu0 0.0
        %409 = vmatpush.msra.mxu0 0.0
        %410 = vmatpush.msra.mxu0 0.0
        %411 = vmatpush.msra.mxu0 0.0
        %412 = vmatpush.msra.mxu0 0.0
        %413 = vmatpush.msra.mxu0 0.0
        %414 = vmatpush.msra.mxu0 0.0
        %415 = vmatpush.msra.mxu0 %v396
        %416 = vmatmul.f32.gmra.mxu0 %v300
        %v417 = vpop.f32.mrf.mxu0
        %v418 = vadd.f32 0.0, %v417
        %419 = vmatmul.f32.gmra.mxu0 %v303
        %v420 = vpop.f32.mrf.mxu0
        %v421 = vadd.f32 0.0, %v420
        %422 = vmatmul.f32.gmra.mxu0 %v306
        %v423 = vpop.f32.mrf.mxu0
        %v424 = vadd.f32 0.0, %v423
        %425 = vmatmul.f32.gmra.mxu0 %v309
        %v426 = vpop.f32.mrf.mxu0
        %v427 = vadd.f32 0.0, %v426
        %428 = vmatmul.f32.gmra.mxu0 %v312
        %v429 = vpop.f32.mrf.mxu0
        %v430 = vadd.f32 0.0, %v429
        %431 = vmatmul.f32.gmra.mxu0 %v315
        %v432 = vpop.f32.mrf.mxu0
        %v433 = vadd.f32 0.0, %v432
        %434 = vmatmul.f32.gmra.mxu0 %v318
        %v435 = vpop.f32.mrf.mxu0
        %v436 = vadd.f32 0.0, %v435
        %437 = vmatmul.f32.gmra.mxu0 %v321
        %v438 = vpop.f32.mrf.mxu0
        %v439 = vadd.f32 0.0, %v438
        %440 = vmatmul.f32.gmra.mxu0 %v324
        %v441 = vpop.f32.mrf.mxu0
        %v442 = vadd.f32 0.0, %v441
        %443 = vmatmul.f32.gmra.mxu0 %v327
        %v444 = vpop.f32.mrf.mxu0
        %v445 = vadd.f32 0.0, %v444
        %446 = vmatmul.f32.gmra.mxu0 %v330
        %v447 = vpop.f32.mrf.mxu0
        %v448 = vadd.f32 0.0, %v447
        %449 = vmatmul.f32.gmra.mxu0 %v333
        %v450 = vpop.f32.mrf.mxu0
        %v451 = vadd.f32 0.0, %v450
        %452 = vmatmul.f32.gmra.mxu0 %v336
        %v453 = vpop.f32.mrf.mxu0
        %v454 = vadd.f32 0.0, %v453
        %455 = vmatmul.f32.gmra.mxu0 %v339
        %v456 = vpop.f32.mrf.mxu0
        %v457 = vadd.f32 0.0, %v456
        %458 = vmatmul.f32.gmra.mxu0 %v342
        %v459 = vpop.f32.mrf.mxu0
        %v460 = vadd.f32 0.0, %v459
        %461 = vmatmul.f32.gmra.mxu0 %v345
        %v462 = vpop.f32.mrf.mxu0
        %v463 = vadd.f32 0.0, %v462
        %464 = vmatmul.f32.gmra.mxu0 %v348
        %v465 = vpop.f32.mrf.mxu0
        %v466 = vadd.f32 0.0, %v465
        %467 = vmatmul.f32.gmra.mxu0 %v351
        %v468 = vpop.f32.mrf.mxu0
        %v469 = vadd.f32 0.0, %v468
        %470 = vmatmul.f32.gmra.mxu0 %v354
        %v471 = vpop.f32.mrf.mxu0
        %v472 = vadd.f32 0.0, %v471
        %473 = vmatmul.f32.gmra.mxu0 %v357
        %v474 = vpop.f32.mrf.mxu0
        %v475 = vadd.f32 0.0, %v474
        %476 = vmatmul.f32.gmra.mxu0 %v360
        %v477 = vpop.f32.mrf.mxu0
        %v478 = vadd.f32 0.0, %v477
        %479 = vmatmul.f32.gmra.mxu0 %v363
        %v480 = vpop.f32.mrf.mxu0
        %v481 = vadd.f32 0.0, %v480
        %482 = vmatmul.f32.gmra.mxu0 %v366
        %v483 = vpop.f32.mrf.mxu0
        %v484 = vadd.f32 0.0, %v483
        %485 = vmatmul.f32.gmra.mxu0 %v369
        %v486 = vpop.f32.mrf.mxu0
        %v487 = vadd.f32 0.0, %v486
        %488 = vmatmul.f32.gmra.mxu0 %v372
        %v489 = vpop.f32.mrf.mxu0
        %v490 = vadd.f32 0.0, %v489
        %491 = vmatmul.f32.gmra.mxu0 %v375
        %v492 = vpop.f32.mrf.mxu0
        %v493 = vadd.f32 0.0, %v492
        %494 = vmatmul.f32.gmra.mxu0 %v378
        %v495 = vpop.f32.mrf.mxu0
        %v496 = vadd.f32 0.0, %v495
        %497 = vmatmul.f32.gmra.mxu0 %v381
        %v498 = vpop.f32.mrf.mxu0
        %v499 = vadd.f32 0.0, %v498
        %500 = vmatmul.f32.gmra.mxu0 %v384
        %v501 = vpop.f32.mrf.mxu0
        %v502 = vadd.f32 0.0, %v501
        %503 = vmatmul.f32.gmra.mxu0 %v387
        %v504 = vpop.f32.mrf.mxu0
        %v505 = vadd.f32 0.0, %v504
        %506 = vmatmul.f32.gmra.mxu0 %v390
        %v507 = vpop.f32.mrf.mxu0
        %v508 = vadd.f32 0.0, %v507
        %509 = vmatmul.f32.gmra.mxu0 %v393
        %v510 = vpop.f32.mrf.mxu0
        %v511 = vadd.f32 0.0, %v510
        %512 = vdwg.mxu0
        %513 = vmatpush.msra.mxu0 0.0
        %514 = vmatpush.msra.mxu0 0.0
        %515 = vmatpush.msra.mxu0 0.0
        %516 = vmatpush.msra.mxu0 0.0
        %517 = vmatpush.msra.mxu0 0.0
        %518 = vmatpush.msra.mxu0 0.0
        %519 = vmatpush.msra.mxu0 0.0
        %520 = vmatpush.msra.mxu0 0.0
        %521 = vmatpush.msra.mxu0 0.0
        %522 = vmatpush.msra.mxu0 0.0
        %523 = vmatpush.msra.mxu0 0.0
        %524 = vmatpush.msra.mxu0 0.0
        %525 = vmatpush.msra.mxu0 0.0
        %526 = vmatpush.msra.mxu0 0.0
        %527 = vmatpush.msra.mxu0 0.0
        %528 = vmatpush.msra.mxu0 %v398
        %529 = vmatmul.f32.gmra.mxu0 %v300
        %v530 = vpop.f32.mrf.mxu0
        %v531 = vadd.f32 0.0, %v530
        %532 = vmatmul.f32.gmra.mxu0 %v303
        %v533 = vpop.f32.mrf.mxu0
        %v534 = vadd.f32 0.0, %v533
        %535 = vmatmul.f32.gmra.mxu0 %v306
        %v536 = vpop.f32.mrf.mxu0
        %v537 = vadd.f32 0.0, %v536
        %538 = vmatmul.f32.gmra.mxu0 %v309
        %v539 = vpop.f32.mrf.mxu0
        %v540 = vadd.f32 0.0, %v539
        %541 = vmatmul.f32.gmra.mxu0 %v312
        %v542 = vpop.f32.mrf.mxu0
        %v543 = vadd.f32 0.0, %v542
        %544 = vmatmul.f32.gmra.mxu0 %v315
        %v545 = vpop.f32.mrf.mxu0
        %v546 = vadd.f32 0.0, %v545
        %547 = vmatmul.f32.gmra.mxu0 %v318
        %v548 = vpop.f32.mrf.mxu0
        %v549 = vadd.f32 0.0, %v548
        %550 = vmatmul.f32.gmra.mxu0 %v321
        %v551 = vpop.f32.mrf.mxu0
        %v552 = vadd.f32 0.0, %v551
        %553 = vmatmul.f32.gmra.mxu0 %v324
        %v554 = vpop.f32.mrf.mxu0
        %v555 = vadd.f32 0.0, %v554
        %556 = vmatmul.f32.gmra.mxu0 %v327
        %v557 = vpop.f32.mrf.mxu0
        %v558 = vadd.f32 0.0, %v557
        %559 = vmatmul.f32.gmra.mxu0 %v330
        %v560 = vpop.f32.mrf.mxu0
        %v561 = vadd.f32 0.0, %v560
        %562 = vmatmul.f32.gmra.mxu0 %v333
        %v563 = vpop.f32.mrf.mxu0
        %v564 = vadd.f32 0.0, %v563
        %565 = vmatmul.f32.gmra.mxu0 %v336
        %v566 = vpop.f32.mrf.mxu0
        %v567 = vadd.f32 0.0, %v566
        %568 = vmatmul.f32.gmra.mxu0 %v339
        %v569 = vpop.f32.mrf.mxu0
        %v570 = vadd.f32 0.0, %v569
        %571 = vmatmul.f32.gmra.mxu0 %v342
        %v572 = vpop.f32.mrf.mxu0
        %v573 = vadd.f32 0.0, %v572
        %574 = vmatmul.f32.gmra.mxu0 %v345
        %v575 = vpop.f32.mrf.mxu0
        %v576 = vadd.f32 0.0, %v575
        %577 = vmatmul.f32.gmra.mxu0 %v348
        %v578 = vpop.f32.mrf.mxu0
        %v579 = vadd.f32 0.0, %v578
        %580 = vmatmul.f32.gmra.mxu0 %v351
        %v581 = vpop.f32.mrf.mxu0
        %v582 = vadd.f32 0.0, %v581
        %583 = vmatmul.f32.gmra.mxu0 %v354
        %v584 = vpop.f32.mrf.mxu0
        %v585 = vadd.f32 0.0, %v584
        %586 = vmatmul.f32.gmra.mxu0 %v357
        %v587 = vpop.f32.mrf.mxu0
        %v588 = vadd.f32 0.0, %v587
        %589 = vmatmul.f32.gmra.mxu0 %v360
        %v590 = vpop.f32.mrf.mxu0
        %v591 = vadd.f32 0.0, %v590
        %592 = vmatmul.f32.gmra.mxu0 %v363
        %v593 = vpop.f32.mrf.mxu0
        %v594 = vadd.f32 0.0, %v593
        %595 = vmatmul.f32.gmra.mxu0 %v366
        %v596 = vpop.f32.mrf.mxu0
        %v597 = vadd.f32 0.0, %v596
        %598 = vmatmul.f32.gmra.mxu0 %v369
        %v599 = vpop.f32.mrf.mxu0
        %v600 = vadd.f32 0.0, %v599
        %601 = vmatmul.f32.gmra.mxu0 %v372
        %v602 = vpop.f32.mrf.mxu0
        %v603 = vadd.f32 0.0, %v602
        %604 = vmatmul.f32.gmra.mxu0 %v375
        %v605 = vpop.f32.mrf.mxu0
        %v606 = vadd.f32 0.0, %v605
        %607 = vmatmul.f32.gmra.mxu0 %v378
        %v608 = vpop.f32.mrf.mxu0
        %v609 = vadd.f32 0.0, %v608
        %610 = vmatmul.f32.gmra.mxu0 %v381
        %v611 = vpop.f32.mrf.mxu0
        %v612 = vadd.f32 0.0, %v611
        %613 = vmatmul.f32.gmra.mxu0 %v384
        %v614 = vpop.f32.mrf.mxu0
        %v615 = vadd.f32 0.0, %v614
        %616 = vmatmul.f32.gmra.mxu0 %v387
        %v617 = vpop.f32.mrf.mxu0
        %v618 = vadd.f32 0.0, %v617
        %619 = vmatmul.f32.gmra.mxu0 %v390
        %v620 = vpop.f32.mrf.mxu0
        %v621 = vadd.f32 0.0, %v620
        %622 = vmatmul.f32.gmra.mxu0 %v393
        %v623 = vpop.f32.mrf.mxu0
        %v624 = vadd.f32 0.0, %v623
        %625 = vdwg.mxu0
        %v626 = vmax.f32 %v418, %v531
        %627 = vmax.xlane.f32.xlu0 %v626
        %v628 = vpop.xlane.xlu0 %627
        %v629 = vmax.f32 %v421, %v534
        %630 = vmax.xlane.f32.xlu0 %v629
        %v631 = vpop.xlane.xlu0 %630
        %v632 = vmax.f32 %v424, %v537
        %633 = vmax.xlane.f32.xlu0 %v632
        %v634 = vpop.xlane.xlu0 %633
        %v635 = vmax.f32 %v427, %v540
        %636 = vmax.xlane.f32.xlu0 %v635
        %v637 = vpop.xlane.xlu0 %636
        %v638 = vmax.f32 %v430, %v543
        %639 = vmax.xlane.f32.xlu0 %v638
        %v640 = vpop.xlane.xlu0 %639
        %v641 = vmax.f32 %v433, %v546
        %642 = vmax.xlane.f32.xlu0 %v641
        %v643 = vpop.xlane.xlu0 %642
        %v644 = vmax.f32 %v436, %v549
        %645 = vmax.xlane.f32.xlu0 %v644
        %v646 = vpop.xlane.xlu0 %645
        %v647 = vmax.f32 %v439, %v552
        %648 = vmax.xlane.f32.xlu0 %v647
        %v649 = vpop.xlane.xlu0 %648
        %v650 = vmax.f32 %v442, %v555
        %651 = vmax.xlane.f32.xlu0 %v650
        %v652 = vpop.xlane.xlu0 %651
        %v653 = vmax.f32 %v445, %v558
        %654 = vmax.xlane.f32.xlu0 %v653
        %v655 = vpop.xlane.xlu0 %654
        %v656 = vmax.f32 %v448, %v561
        %657 = vmax.xlane.f32.xlu0 %v656
        %v658 = vpop.xlane.xlu0 %657
        %v659 = vmax.f32 %v451, %v564
        %660 = vmax.xlane.f32.xlu0 %v659
        %v661 = vpop.xlane.xlu0 %660
        %v662 = vmax.f32 %v454, %v567
        %663 = vmax.xlane.f32.xlu0 %v662
        %v664 = vpop.xlane.xlu0 %663
        %v665 = vmax.f32 %v457, %v570
        %666 = vmax.xlane.f32.xlu0 %v665
        %v667 = vpop.xlane.xlu0 %666
        %v668 = vmax.f32 %v460, %v573
        %669 = vmax.xlane.f32.xlu0 %v668
        %v670 = vpop.xlane.xlu0 %669
        %v671 = vmax.f32 %v463, %v576
        %672 = vmax.xlane.f32.xlu0 %v671
        %v673 = vpop.xlane.xlu0 %672
        %v674 = vmax.f32 %v466, %v579
        %675 = vmax.xlane.f32.xlu0 %v674
        %v676 = vpop.xlane.xlu0 %675
        %v677 = vmax.f32 %v469, %v582
        %678 = vmax.xlane.f32.xlu0 %v677
        %v679 = vpop.xlane.xlu0 %678
        %v680 = vmax.f32 %v472, %v585
        %681 = vmax.xlane.f32.xlu0 %v680
        %v682 = vpop.xlane.xlu0 %681
        %v683 = vmax.f32 %v475, %v588
        %684 = vmax.xlane.f32.xlu0 %v683
        %v685 = vpop.xlane.xlu0 %684
        %v686 = vmax.f32 %v478, %v591
        %687 = vmax.xlane.f32.xlu0 %v686
        %v688 = vpop.xlane.xlu0 %687
        %v689 = vmax.f32 %v481, %v594
        %690 = vmax.xlane.f32.xlu0 %v689
        %v691 = vpop.xlane.xlu0 %690
        %v692 = vmax.f32 %v484, %v597
        %693 = vmax.xlane.f32.xlu0 %v692
        %v694 = vpop.xlane.xlu0 %693
        %v695 = vmax.f32 %v487, %v600
        %696 = vmax.xlane.f32.xlu0 %v695
        %v697 = vpop.xlane.xlu0 %696
        %v698 = vmax.f32 %v490, %v603
        %699 = vmax.xlane.f32.xlu0 %v698
        %v700 = vpop.xlane.xlu0 %699
        %v701 = vmax.f32 %v493, %v606
        %702 = vmax.xlane.f32.xlu0 %v701
        %v703 = vpop.xlane.xlu0 %702
        %v704 = vmax.f32 %v496, %v609
        %705 = vmax.xlane.f32.xlu0 %v704
        %v706 = vpop.xlane.xlu0 %705
        %v707 = vmax.f32 %v499, %v612
        %708 = vmax.xlane.f32.xlu0 %v707
        %v709 = vpop.xlane.xlu0 %708
        %v710 = vmax.f32 %v502, %v615
        %711 = vmax.xlane.f32.xlu0 %v710
        %v712 = vpop.xlane.xlu0 %711
        %v713 = vmax.f32 %v505, %v618
        %714 = vmax.xlane.f32.xlu0 %v713
        %v715 = vpop.xlane.xlu0 %714
        %v716 = vmax.f32 %v508, %v621
        %717 = vmax.xlane.f32.xlu0 %v716
        %v718 = vpop.xlane.xlu0 %717
        %v719 = vmax.f32 %v511, %v624
        %720 = vmax.xlane.f32.xlu0 %v719
        %v721 = vpop.xlane.xlu0 %720
        %v722 = vsub.f32 %v418, %v628
        %v723 = vsub.f32 %v531, %v628
        %v724 = vsub.f32 %v421, %v631
        %v725 = vsub.f32 %v534, %v631
        %v726 = vsub.f32 %v424, %v634
        %v727 = vsub.f32 %v537, %v634
        %v728 = vsub.f32 %v427, %v637
        %v729 = vsub.f32 %v540, %v637
        %v730 = vsub.f32 %v430, %v640
        %v731 = vsub.f32 %v543, %v640
        %v732 = vsub.f32 %v433, %v643
        %v733 = vsub.f32 %v546, %v643
        %v734 = vsub.f32 %v436, %v646
        %v735 = vsub.f32 %v549, %v646
        %v736 = vsub.f32 %v439, %v649
        %v737 = vsub.f32 %v552, %v649
        %v738 = vsub.f32 %v442, %v652
        %v739 = vsub.f32 %v555, %v652
        %v740 = vsub.f32 %v445, %v655
        %v741 = vsub.f32 %v558, %v655
        %v742 = vsub.f32 %v448, %v658
        %v743 = vsub.f32 %v561, %v658
        %v744 = vsub.f32 %v451, %v661
        %v745 = vsub.f32 %v564, %v661
        %v746 = vsub.f32 %v454, %v664
        %v747 = vsub.f32 %v567, %v664
        %v748 = vsub.f32 %v457, %v667
        %v749 = vsub.f32 %v570, %v667
        %v750 = vsub.f32 %v460, %v670
        %v751 = vsub.f32 %v573, %v670
        %v752 = vsub.f32 %v463, %v673
        %v753 = vsub.f32 %v576, %v673
        %v754 = vsub.f32 %v466, %v676
        %v755 = vsub.f32 %v579, %v676
        %v756 = vsub.f32 %v469, %v679
        %v757 = vsub.f32 %v582, %v679
        %v758 = vsub.f32 %v472, %v682
        %v759 = vsub.f32 %v585, %v682
        %v760 = vsub.f32 %v475, %v685
        %v761 = vsub.f32 %v588, %v685
        %v762 = vsub.f32 %v478, %v688
        %v763 = vsub.f32 %v591, %v688
        %v764 = vsub.f32 %v481, %v691
        %v765 = vsub.f32 %v594, %v691
        %v766 = vsub.f32 %v484, %v694
        %v767 = vsub.f32 %v597, %v694
        %v768 = vsub.f32 %v487, %v697
        %v769 = vsub.f32 %v600, %v697
        %v770 = vsub.f32 %v490, %v700
        %v771 = vsub.f32 %v603, %v700
        %v772 = vsub.f32 %v493, %v703
        %v773 = vsub.f32 %v606, %v703
        %v774 = vsub.f32 %v496, %v706
        %v775 = vsub.f32 %v609, %v706
        %v776 = vsub.f32 %v499, %v709
        %v777 = vsub.f32 %v612, %v709
        %v778 = vsub.f32 %v502, %v712
        %v779 = vsub.f32 %v615, %v712
        %v780 = vsub.f32 %v505, %v715
        %v781 = vsub.f32 %v618, %v715
        %v782 = vsub.f32 %v508, %v718
        %v783 = vsub.f32 %v621, %v718
        %v784 = vsub.f32 %v511, %v721
        %v785 = vsub.f32 %v624, %v721
        %v786 = vmul.f32 %v722, 1.442695
        %v787 = vpow.pop %v786
        %v788 = vmul.f32 %v723, 1.442695
        %v789 = vpow.pop %v788
        %v790 = vmul.f32 %v724, 1.442695
        %v791 = vpow.pop %v790
        %v792 = vmul.f32 %v725, 1.442695
        %v793 = vpow.pop %v792
        %v794 = vmul.f32 %v726, 1.442695
        %v795 = vpow.pop %v794
        %v796 = vmul.f32 %v727, 1.442695
        %v797 = vpow.pop %v796
        %v798 = vmul.f32 %v728, 1.442695
        %v799 = vpow.pop %v798
        %v800 = vmul.f32 %v729, 1.442695
        %v801 = vpow.pop %v800
        %v802 = vmul.f32 %v730, 1.442695
        %v803 = vpow.pop %v802
        %v804 = vmul.f32 %v731, 1.442695
        %v805 = vpow.pop %v804
        %v806 = vmul.f32 %v732, 1.442695
        %v807 = vpow.pop %v806
        %v808 = vmul.f32 %v733, 1.442695
        %v809 = vpow.pop %v808
        %v810 = vmul.f32 %v734, 1.442695
        %v811 = vpow.pop %v810
        %v812 = vmul.f32 %v735, 1.442695
        %v813 = vpow.pop %v812
        %v814 = vmul.f32 %v736, 1.442695
        %v815 = vpow.pop %v814
        %v816 = vmul.f32 %v737, 1.442695
        %v817 = vpow.pop %v816
        %v818 = vmul.f32 %v738, 1.442695
        %v819 = vpow.pop %v818
        %v820 = vmul.f32 %v739, 1.442695
        %v821 = vpow.pop %v820
        %v822 = vmul.f32 %v740, 1.442695
        %v823 = vpow.pop %v822
        %v824 = vmul.f32 %v741, 1.442695
        %v825 = vpow.pop %v824
        %v826 = vmul.f32 %v742, 1.442695
        %v827 = vpow.pop %v826
        %v828 = vmul.f32 %v743, 1.442695
        %v829 = vpow.pop %v828
        %v830 = vmul.f32 %v744, 1.442695
        %v831 = vpow.pop %v830
        %v832 = vmul.f32 %v745, 1.442695
        %v833 = vpow.pop %v832
        %v834 = vmul.f32 %v746, 1.442695
        %v835 = vpow.pop %v834
        %v836 = vmul.f32 %v747, 1.442695
        %v837 = vpow.pop %v836
        %v838 = vmul.f32 %v748, 1.442695
        %v839 = vpow.pop %v838
        %v840 = vmul.f32 %v749, 1.442695
        %v841 = vpow.pop %v840
        %v842 = vmul.f32 %v750, 1.442695
        %v843 = vpow.pop %v842
        %v844 = vmul.f32 %v751, 1.442695
        %v845 = vpow.pop %v844
        %v846 = vmul.f32 %v752, 1.442695
        %v847 = vpow.pop %v846
        %v848 = vmul.f32 %v753, 1.442695
        %v849 = vpow.pop %v848
        %v850 = vmul.f32 %v754, 1.442695
        %v851 = vpow.pop %v850
        %v852 = vmul.f32 %v755, 1.442695
        %v853 = vpow.pop %v852
        %v854 = vmul.f32 %v756, 1.442695
        %v855 = vpow.pop %v854
        %v856 = vmul.f32 %v757, 1.442695
        %v857 = vpow.pop %v856
        %v858 = vmul.f32 %v758, 1.442695
        %v859 = vpow.pop %v858
        %v860 = vmul.f32 %v759, 1.442695
        %v861 = vpow.pop %v860
        %v862 = vmul.f32 %v760, 1.442695
        %v863 = vpow.pop %v862
        %v864 = vmul.f32 %v761, 1.442695
        %v865 = vpow.pop %v864
        %v866 = vmul.f32 %v762, 1.442695
        %v867 = vpow.pop %v866
        %v868 = vmul.f32 %v763, 1.442695
        %v869 = vpow.pop %v868
        %v870 = vmul.f32 %v764, 1.442695
        %v871 = vpow.pop %v870
        %v872 = vmul.f32 %v765, 1.442695
        %v873 = vpow.pop %v872
        %v874 = vmul.f32 %v766, 1.442695
        %v875 = vpow.pop %v874
        %v876 = vmul.f32 %v767, 1.442695
        %v877 = vpow.pop %v876
        %v878 = vmul.f32 %v768, 1.442695
        %v879 = vpow.pop %v878
        %v880 = vmul.f32 %v769, 1.442695
        %v881 = vpow.pop %v880
        %v882 = vmul.f32 %v770, 1.442695
        %v883 = vpow.pop %v882
        %v884 = vmul.f32 %v771, 1.442695
        %v885 = vpow.pop %v884
        %v886 = vmul.f32 %v772, 1.442695
        %v887 = vpow.pop %v886
        %v888 = vmul.f32 %v773, 1.442695
        %v889 = vpow.pop %v888
        %v890 = vmul.f32 %v774, 1.442695
        %v891 = vpow.pop %v890
        %v892 = vmul.f32 %v775, 1.442695
        %v893 = vpow.pop %v892
        %v894 = vmul.f32 %v776, 1.442695
        %v895 = vpow.pop %v894
        %v896 = vmul.f32 %v777, 1.442695
        %v897 = vpow.pop %v896
        %v898 = vmul.f32 %v778, 1.442695
        %v899 = vpow.pop %v898
        %v900 = vmul.f32 %v779, 1.442695
        %v901 = vpow.pop %v900
        %v902 = vmul.f32 %v780, 1.442695
        %v903 = vpow.pop %v902
        %v904 = vmul.f32 %v781, 1.442695
        %v905 = vpow.pop %v904
        %v906 = vmul.f32 %v782, 1.442695
        %v907 = vpow.pop %v906
        %v908 = vmul.f32 %v783, 1.442695
        %v909 = vpow.pop %v908
        %v910 = vmul.f32 %v784, 1.442695
        %v911 = vpow.pop %v910
        %v912 = vmul.f32 %v785, 1.442695
        %v913 = vpow.pop %v912
        %v914 = vadd.f32 %v787, %v789
        %915 = vadd.xlane.f32.xlu0 %v914
        %v916 = vpop.xlane.xlu0 %915
        %v917 = vadd.f32 %v791, %v793
        %918 = vadd.xlane.f32.xlu0 %v917
        %v919 = vpop.xlane.xlu0 %918
        %v920 = vadd.f32 %v795, %v797
        %921 = vadd.xlane.f32.xlu0 %v920
        %v922 = vpop.xlane.xlu0 %921
        %v923 = vadd.f32 %v799, %v801
        %924 = vadd.xlane.f32.xlu0 %v923
        %v925 = vpop.xlane.xlu0 %924
        %v926 = vadd.f32 %v803, %v805
        %927 = vadd.xlane.f32.xlu0 %v926
        %v928 = vpop.xlane.xlu0 %927
        %v929 = vadd.f32 %v807, %v809
        %930 = vadd.xlane.f32.xlu0 %v929
        %v931 = vpop.xlane.xlu0 %930
        %v932 = vadd.f32 %v811, %v813
        %933 = vadd.xlane.f32.xlu0 %v932
        %v934 = vpop.xlane.xlu0 %933
        %v935 = vadd.f32 %v815, %v817
        %936 = vadd.xlane.f32.xlu0 %v935
        %v937 = vpop.xlane.xlu0 %936
        %v938 = vadd.f32 %v819, %v821
        %939 = vadd.xlane.f32.xlu0 %v938
        %v940 = vpop.xlane.xlu0 %939
        %v941 = vadd.f32 %v823, %v825
        %942 = vadd.xlane.f32.xlu0 %v941
        %v943 = vpop.xlane.xlu0 %942
        %v944 = vadd.f32 %v827, %v829
        %945 = vadd.xlane.f32.xlu0 %v944
        %v946 = vpop.xlane.xlu0 %945
        %v947 = vadd.f32 %v831, %v833
        %948 = vadd.xlane.f32.xlu0 %v947
        %v949 = vpop.xlane.xlu0 %948
        %v950 = vadd.f32 %v835, %v837
        %951 = vadd.xlane.f32.xlu0 %v950
        %v952 = vpop.xlane.xlu0 %951
        %v953 = vadd.f32 %v839, %v841
        %954 = vadd.xlane.f32.xlu0 %v953
        %v955 = vpop.xlane.xlu0 %954
        %v956 = vadd.f32 %v843, %v845
        %957 = vadd.xlane.f32.xlu0 %v956
        %v958 = vpop.xlane.xlu0 %957
        %v959 = vadd.f32 %v847, %v849
        %960 = vadd.xlane.f32.xlu0 %v959
        %v961 = vpop.xlane.xlu0 %960
        %v962 = vadd.f32 %v851, %v853
        %963 = vadd.xlane.f32.xlu0 %v962
        %v964 = vpop.xlane.xlu0 %963
        %v965 = vadd.f32 %v855, %v857
        %966 = vadd.xlane.f32.xlu0 %v965
        %v967 = vpop.xlane.xlu0 %966
        %v968 = vadd.f32 %v859, %v861
        %969 = vadd.xlane.f32.xlu0 %v968
        %v970 = vpop.xlane.xlu0 %969
        %v971 = vadd.f32 %v863, %v865
        %972 = vadd.xlane.f32.xlu0 %v971
        %v973 = vpop.xlane.xlu0 %972
        %v974 = vadd.f32 %v867, %v869
        %975 = vadd.xlane.f32.xlu0 %v974
        %v976 = vpop.xlane.xlu0 %975
        %v977 = vadd.f32 %v871, %v873
        %978 = vadd.xlane.f32.xlu0 %v977
        %v979 = vpop.xlane.xlu0 %978
        %v980 = vadd.f32 %v875, %v877
        %981 = vadd.xlane.f32.xlu0 %v980
        %v982 = vpop.xlane.xlu0 %981
        %v983 = vadd.f32 %v879, %v881
        %984 = vadd.xlane.f32.xlu0 %v983
        %v985 = vpop.xlane.xlu0 %984
        %v986 = vadd.f32 %v883, %v885
        %987 = vadd.xlane.f32.xlu0 %v986
        %v988 = vpop.xlane.xlu0 %987
        %v989 = vadd.f32 %v887, %v889
        %990 = vadd.xlane.f32.xlu0 %v989
        %v991 = vpop.xlane.xlu0 %990
        %v992 = vadd.f32 %v891, %v893
        %993 = vadd.xlane.f32.xlu0 %v992
        %v994 = vpop.xlane.xlu0 %993
        %v995 = vadd.f32 %v895, %v897
        %996 = vadd.xlane.f32.xlu0 %v995
        %v997 = vpop.xlane.xlu0 %996
        %v998 = vadd.f32 %v899, %v901
        %999 = vadd.xlane.f32.xlu0 %v998
        %v1000 = vpop.xlane.xlu0 %999
        %v1001 = vadd.f32 %v903, %v905
        %1002 = vadd.xlane.f32.xlu0 %v1001
        %v1003 = vpop.xlane.xlu0 %1002
        %v1004 = vadd.f32 %v907, %v909
        %1005 = vadd.xlane.f32.xlu0 %v1004
        %v1006 = vpop.xlane.xlu0 %1005
        %v1007 = vadd.f32 %v911, %v913
        %1008 = vadd.xlane.f32.xlu0 %v1007
        %v1009 = vpop.xlane.xlu0 %1008
        %v1010 = vrcp.pop %v916
        %v1011 = vrcp.pop %v919
        %v1012 = vrcp.pop %v922
        %v1013 = vrcp.pop %v925
        %v1014 = vrcp.pop %v928
        %v1015 = vrcp.pop %v931
        %v1016 = vrcp.pop %v934
        %v1017 = vrcp.pop %v937
        %v1018 = vrcp.pop %v940
        %v1019 = vrcp.pop %v943
        %v1020 = vrcp.pop %v946
        %v1021 = vrcp.pop %v949
        %v1022 = vrcp.pop %v952
        %v1023 = vrcp.pop %v955
        %v1024 = vrcp.pop %v958
        %v1025 = vrcp.pop %v961
        %v1026 = vrcp.pop %v964
        %v1027 = vrcp.pop %v967
        %v1028 = vrcp.pop %v970
        %v1029 = vrcp.pop %v973
        %v1030 = vrcp.pop %v976
        %v1031 = vrcp.pop %v979
        %v1032 = vrcp.pop %v982
        %v1033 = vrcp.pop %v985
        %v1034 = vrcp.pop %v988
        %v1035 = vrcp.pop %v991
        %v1036 = vrcp.pop %v994
        %v1037 = vrcp.pop %v997
        %v1038 = vrcp.pop %v1000
        %v1039 = vrcp.pop %v1003
        %v1040 = vrcp.pop %v1006
        %v1041 = vrcp.pop %v1009
        %v1042 = vmul.f32 %v787, %v1010
        %v1043 = vmul.f32 %v789, %v1010
        %v1044 = vmul.f32 %v791, %v1011
        %v1045 = vmul.f32 %v793, %v1011
        %v1046 = vmul.f32 %v795, %v1012
        %v1047 = vmul.f32 %v797, %v1012
        %v1048 = vmul.f32 %v799, %v1013
        %v1049 = vmul.f32 %v801, %v1013
        %v1050 = vmul.f32 %v803, %v1014
        %v1051 = vmul.f32 %v805, %v1014
        %v1052 = vmul.f32 %v807, %v1015
        %v1053 = vmul.f32 %v809, %v1015
        %v1054 = vmul.f32 %v811, %v1016
        %v1055 = vmul.f32 %v813, %v1016
        %v1056 = vmul.f32 %v815, %v1017
        %v1057 = vmul.f32 %v817, %v1017
        %v1058 = vmul.f32 %v819, %v1018
        %v1059 = vmul.f32 %v821, %v1018
        %v1060 = vmul.f32 %v823, %v1019
        %v1061 = vmul.f32 %v825, %v1019
        %v1062 = vmul.f32 %v827, %v1020
        %v1063 = vmul.f32 %v829, %v1020
        %v1064 = vmul.f32 %v831, %v1021
        %v1065 = vmul.f32 %v833, %v1021
        %v1066 = vmul.f32 %v835, %v1022
        %v1067 = vmul.f32 %v837, %v1022
        %v1068 = vmul.f32 %v839, %v1023
        %v1069 = vmul.f32 %v841, %v1023
        %v1070 = vmul.f32 %v843, %v1024
        %v1071 = vmul.f32 %v845, %v1024
        %v1072 = vmul.f32 %v847, %v1025
        %v1073 = vmul.f32 %v849, %v1025
        %v1074 = vmul.f32 %v851, %v1026
        %v1075 = vmul.f32 %v853, %v1026
        %v1076 = vmul.f32 %v855, %v1027
        %v1077 = vmul.f32 %v857, %v1027
        %v1078 = vmul.f32 %v859, %v1028
        %v1079 = vmul.f32 %v861, %v1028
        %v1080 = vmul.f32 %v863, %v1029
        %v1081 = vmul.f32 %v865, %v1029
        %v1082 = vmul.f32 %v867, %v1030
        %v1083 = vmul.f32 %v869, %v1030
        %v1084 = vmul.f32 %v871, %v1031
        %v1085 = vmul.f32 %v873, %v1031
        %v1086 = vmul.f32 %v875, %v1032
        %v1087 = vmul.f32 %v877, %v1032
        %v1088 = vmul.f32 %v879, %v1033
        %v1089 = vmul.f32 %v881, %v1033
        %v1090 = vmul.f32 %v883, %v1034
        %v1091 = vmul.f32 %v885, %v1034
        %v1092 = vmul.f32 %v887, %v1035
        %v1093 = vmul.f32 %v889, %v1035
        %v1094 = vmul.f32 %v891, %v1036
        %v1095 = vmul.f32 %v893, %v1036
        %v1096 = vmul.f32 %v895, %v1037
        %v1097 = vmul.f32 %v897, %v1037
        %v1098 = vmul.f32 %v899, %v1038
        %v1099 = vmul.f32 %v901, %v1038
        %v1100 = vmul.f32 %v903, %v1039
        %v1101 = vmul.f32 %v905, %v1039
        %v1102 = vmul.f32 %v907, %v1040
        %v1103 = vmul.f32 %v909, %v1040
        %v1104 = vmul.f32 %v911, %v1041
        %v1105 = vmul.f32 %v913, %v1041
        %1106 = vst [vmem:[#allocation1] ss:$2 sm:$0xff] %v223
        %v1107 = vld.sshfl [vmem:[#allocation1] sm:$0xff pattern:$0x75316420]
        %v1108 = vld.sshfl [vmem:[#allocation1 + $0x8] sm:$0xff pattern:$0x75316420]
        %1111 = vmatpush.xpose.msra.mxu0 %v1072
        %1112 = vmatpush.xpose.msra.mxu0 %v1070
        %1113 = vmatpush.xpose.msra.mxu0 %v1068
        %1114 = vmatpush.xpose.msra.mxu0 %v1066
        %1115 = vmatpush.xpose.msra.mxu0 %v1064
        %1116 = vmatpush.xpose.msra.mxu0 %v1062
        %1117 = vmatpush.xpose.msra.mxu0 %v1060
        %1118 = vmatpush.xpose.msra.mxu0 %v1058
        %1119 = vmatpush.xpose.msra.mxu0 %v1056
        %1120 = vmatpush.xpose.msra.mxu0 %v1054
        %1121 = vmatpush.xpose.msra.mxu0 %v1052
        %1122 = vmatpush.xpose.msra.mxu0 %v1050
        %1123 = vmatpush.xpose.msra.mxu0 %v1048
        %1124 = vmatpush.xpose.msra.mxu0 %v1046
        %1125 = vmatpush.xpose.msra.mxu0 %v1044
        %1126 = vmatpush.xpose.msra.mxu0 %v1042
        %1127 = vmatmul.f32.gmra.mxu0 %v1107
        %v1128 = vpop.f32.mrf.mxu0
        %v1129 = vadd.f32 0.0, %v1128
        %1130 = vdwg.mxu0
        %1131 = vmatpush.xpose.msra.mxu0 %v1073
        %1132 = vmatpush.xpose.msra.mxu0 %v1071
        %1133 = vmatpush.xpose.msra.mxu0 %v1069
        %1134 = vmatpush.xpose.msra.mxu0 %v1067
        %1135 = vmatpush.xpose.msra.mxu0 %v1065
        %1136 = vmatpush.xpose.msra.mxu0 %v1063
        %1137 = vmatpush.xpose.msra.mxu0 %v1061
        %1138 = vmatpush.xpose.msra.mxu0 %v1059
        %1139 = vmatpush.xpose.msra.mxu0 %v1057
        %1140 = vmatpush.xpose.msra.mxu0 %v1055
        %1141 = vmatpush.xpose.msra.mxu0 %v1053
        %1142 = vmatpush.xpose.msra.mxu0 %v1051
        %1143 = vmatpush.xpose.msra.mxu0 %v1049
        %1144 = vmatpush.xpose.msra.mxu0 %v1047
        %1145 = vmatpush.xpose.msra.mxu0 %v1045
        %1146 = vmatpush.xpose.msra.mxu0 %v1043
        %1147 = vmatmul.f32.gmra.mxu0 %v1108
        %v1148 = vpop.f32.mrf.mxu0
        %v1149 = vadd.f32 %v1129, %v1148
        %1150 = vdwg.mxu0
        %1151 = vmatpush.xpose.msra.mxu0 %v1104
        %1152 = vmatpush.xpose.msra.mxu0 %v1102
        %1153 = vmatpush.xpose.msra.mxu0 %v1100
        %1154 = vmatpush.xpose.msra.mxu0 %v1098
        %1155 = vmatpush.xpose.msra.mxu0 %v1096
        %1156 = vmatpush.xpose.msra.mxu0 %v1094
        %1157 = vmatpush.xpose.msra.mxu0 %v1092
        %1158 = vmatpush.xpose.msra.mxu0 %v1090
        %1159 = vmatpush.xpose.msra.mxu0 %v1088
        %1160 = vmatpush.xpose.msra.mxu0 %v1086
        %1161 = vmatpush.xpose.msra.mxu0 %v1084
        %1162 = vmatpush.xpose.msra.mxu0 %v1082
        %1163 = vmatpush.xpose.msra.mxu0 %v1080
        %1164 = vmatpush.xpose.msra.mxu0 %v1078
        %1165 = vmatpush.xpose.msra.mxu0 %v1076
        %1166 = vmatpush.xpose.msra.mxu0 %v1074
        %1167 = vmatmul.f32.gmra.mxu0 %v1107
        %v1168 = vpop.f32.mrf.mxu0
        %v1169 = vadd.f32 0.0, %v1168
        %1170 = vdwg.mxu0
        %1171 = vmatpush.xpose.msra.mxu0 %v1105
        %1172 = vmatpush.xpose.msra.mxu0 %v1103
        %1173 = vmatpush.xpose.msra.mxu0 %v1101
        %1174 = vmatpush.xpose.msra.mxu0 %v1099
        %1175 = vmatpush.xpose.msra.mxu0 %v1097
        %1176 = vmatpush.xpose.msra.mxu0 %v1095
        %1177 = vmatpush.xpose.msra.mxu0 %v1093
        %1178 = vmatpush.xpose.msra.mxu0 %v1091
        %1179 = vmatpush.xpose.msra.mxu0 %v1089
        %1180 = vmatpush.xpose.msra.mxu0 %v1087
        %1181 = vmatpush.xpose.msra.mxu0 %v1085
        %1182 = vmatpush.xpose.msra.mxu0 %v1083
        %1183 = vmatpush.xpose.msra.mxu0 %v1081
        %1184 = vmatpush.xpose.msra.mxu0 %v1079
        %1185 = vmatpush.xpose.msra.mxu0 %v1077
        %1186 = vmatpush.xpose.msra.mxu0 %v1075
        %1187 = vmatmul.f32.gmra.mxu0 %v1108
        %v1188 = vpop.f32.mrf.mxu0
        %v1189 = vadd.f32 %v1169, %v1188
        %1190 = vdwg.mxu0
        %v1193 = vrot.slane %v1189, 4
        %v1194 = vsel %vm395, %v1149, %v1193
        %1196 = vst [vmem:[%s219] sm:$0xff] %v1194
        %s1197 = sand.u32 %s98, 1
        %s1198 = scalar_lea.sflag [#allocation4], %s1197
        %s1199 = sand.u32 %s98, 1
        %s1200 = smul.addr %s1199, 8
        %s1201 = scalar_lea.vmem [#allocation7], %s1200
        // Predicated region
        $region37: #{tpu_custom_call.1} parent=27 // pred_check
          %p1202 = pneg %p108
        $region38: #{tpu_custom_call.1} parent=27 // pred_check_branch
          %1204 = sbr.rel (%p1202) target = $region40
        $region39: #{tpu_custom_call.1} parent=27 // pred_region
          %s1205 = smul.u32 2, %s27
          %1207 = vsyncadd %s1198, 0
          %s1208 = smul.addr %s26, 2
          %s1209 = sadd.s32 %s1205, %s1208
          %s1210 = smul.addr %s1209, 4
          %s1211 = scalar_lea.hbm %s2, %s1210
          %s1213 = sshll.u32 %s1201, 4
          %s1214 = int_to_ptr.vmem [resolvable:$true] %s1213
          %s1215 = sshll.u32 %s1211, 4
          %s1216 = int_to_ptr.hbm [resolvable:$true] %s1215
          %1218 = dma.vmem_to_hbm [thread:$0]  %s1214, 128, %s1216, %s1198
        $region40: #{tpu_custom_call.1} parent=27 // pred_fallthru
          _
      $region28: #{tpu_custom_call.1} parent=5 // pred_fallthru
        _
      %p1219 = scmp.le.s32.totalorder 2, %s17
      // Predicated region
      $region41: #{tpu_custom_call.1} parent=5 // pred_check
        %p1220 = pneg %p1219
      $region42: #{tpu_custom_call.1} parent=5 // pred_check_branch
        %1222 = sbr.rel (%p1220) target = $region44
      $region43: #{tpu_custom_call.1} parent=5 // pred_region
        %s1223 = ssub.s32 %s17, 2
        // Predicated region
        $region45: #{tpu_custom_call.1} parent=43 // pred_check
          %p1224 = pneg %p114
        $region46: #{tpu_custom_call.1} parent=43 // pred_check_branch
          %1226 = sbr.rel (%p1224) target = $region48
        $region47: #{tpu_custom_call.1} parent=43 // pred_region
          %s1227 = sand.u32 %s99, 1
          %s1228 = scalar_lea.sflag [#allocation4], %s1227
          %s1229 = sand.u32 %s99, 1
          %s1230 = smul.addr %s1229, 8
          %s1231 = scalar_lea.vmem [#allocation7], %s1230
          %1233 = dma.done %s1228, 128
        $region48: #{tpu_custom_call.1} parent=43 // pred_fallthru
          _
      $region44: #{tpu_custom_call.1} parent=5 // pred_fallthru
        _
    $region6: #{tpu_custom_call.1} parent=1 // loop_footer
      %s21 = sadd.s32 1, %s17
    $region7: #{tpu_custom_call.1} parent=1 // loop_footer_branch
      %16 = sbr.rel target = $region3
    $region8: #{tpu_custom_call.1} parent=1 // loop_exit
      _
    %1234 = vsyncpa [#allocation3], 1
    %s1235 = scalar_lea.sflag [#allocation3], 1
    %1236 = vsyncpa %s1235, 1
    %1237 = vsyncpa [#allocation6], 1
    %s1238 = scalar_lea.sflag [#allocation6], 1
    %1239 = vsyncpa %s1238, 1
    %1240 = vsyncpa [#allocation4], 1
    %s1241 = scalar_lea.sflag [#allocation4], 1
    %1242 = vsyncpa %s1241, 1

</llo_original>
